<compile_context>
chip_gen: v6e
topology: v6e:2x2x1
jax: 0.10.0
libtpu: 0.0.40
codegen_flags: <defaults>
</compile_context>

<pallas_src>
import functools

import jax
import jax.numpy as jnp
import numpy as np
from jax import lax
from jax.experimental import pallas as pl
from jax.experimental.pallas import tpu as pltpu

NEG_SLOPE = 0.2                    # PyG GATConv default LeakyReLU negative slope
MASK_VAL = -1e30                   # additive mask for non-edges
NO_EDGE_THRESH = 0.5 * MASK_VAL    # row max below this <=> row has no in-edges


def _vmem_limit_bytes():
    """Per-TC VMEM budget with headroom (v7x: ~51 of 64 MiB, v5e/v6e: ~102 of 128)."""
    cap = 64 * 1024 * 1024
    try:
        cap = int(getattr(pltpu.get_tpu_info(), "vmem_capacity_bytes", cap))
    except Exception:
        pass
    return max(32 * 1024 * 1024, (cap * 4) // 5)


def _pick_proj_tile(n):
    for tp in (512, 256, 128):
        if n % tp == 0 and n // tp >= 2:
            return tp
    return n


def _pick_attn_tile(n, heads, hd_dim, vmem_limit):
    """Largest destination-row tile whose working set fits comfortably in VMEM
    while still giving a >=2-step grid ('parallel' axis -> both v7x TCs)."""
    budget = int(vmem_limit * 0.6)
    fixed = n * hd_dim * 2 + heads * n * 4           # resident bf16 h + f32 a_src
    for tm in (256, 128, 64, 32):
        if n % tm != 0 or n // tm < 2:
            continue
        per_blk = 2 * tm * n                         # int8 adj block, double buffered
        per_blk += 2 * tm * hd_dim * 4               # f32 out block, double buffered
        per_blk += 4 * tm * n * 4                    # live (tm, n) f32 temporaries
        if fixed + per_blk <= budget:
            return tm
    return n


def _block_diag(a, heads, d):
    """(heads, d) -> (heads*d, heads) with A[h*d + k, h] = a[h, k]."""
    rows = jnp.arange(heads * d)
    cols = jnp.repeat(jnp.arange(heads), d)
    return jnp.zeros((heads * d, heads), jnp.float32).at[rows, cols].set(
        a.reshape(-1).astype(jnp.float32))


def gat_project_kernel(x_ref, w_ref, asrc_t_ref, adst_ref,
                       h_ref, asrc_out_ref, adst_out_ref):
    """One row block of the shared per-layer work.

    x:       (TP, Fin)   bf16
    w:       (Fin, H*D)  bf16
    asrc_t:  (H, H*D)    f32 block-diagonal att_src (transposed)
    adst:    (H*D, H)    f32 block-diagonal att_dst
    outputs: h = x@W (TP, H*D) bf16,  a_src^T (H, TP) f32,  a_dst (TP, H) f32
    """
    h = jnp.dot(x_ref[...], w_ref[...], preferred_element_type=jnp.float32)
    h_ref[...] = h.astype(jnp.bfloat16)        # bf16 resident copy for the PV matmul
    # All-head per-source / per-destination scores (tiny matmuls; kept f32 so the
    # softmax logits only carry the x@W bf16 rounding).
    asrc_out_ref[...] = lax.dot_general(
        asrc_t_ref[...], h, (((1,), (1,)), ((), ())),
        preferred_element_type=jnp.float32)
    adst_out_ref[...] = jnp.dot(h, adst_ref[...], preferred_element_type=jnp.float32)


def gat_attn_kernel(h_ref, asrc_ref, adst_ref, adj_ref, b_ref, out_ref, *,
                    heads, d, activation):
    """One block of TM destination rows, all heads.

    h:    (N, H*D)  bf16  resident source features (all nodes)
    asrc: (H, N)    f32   resident per-source scores (all heads)
    adst: (TM, H)   f32   this block's per-destination scores
    adj:  (TM, N)   int8  0/1 mask, adj[i, j] = 1 iff edge j -> i
    b:    (1, H*D)  f32   bias
    out:  (TM, H*D) f32
    """
    h = h_ref[...]
    a_src = asrc_ref[...]
    a_dst = adst_ref[...]
    edge = adj_ref[...] > 0          # hoisted once per block, shared by all heads

    # TODO(synk): for very large N, add a source-column grid axis ("arbitrary")
    # with online-softmax accumulation instead of keeping h / a (TM, N) strip
    # resident, and bit-pack adj to 1 bit per edge.
    for hd in range(heads):
        logits = a_dst[:, hd:hd + 1] + a_src[hd:hd + 1, :]         # (TM, N)
        logits = jnp.maximum(logits, NEG_SLOPE * logits)           # LeakyReLU(0.2)
        masked = jnp.where(edge, logits, jnp.float32(MASK_VAL))
        m = jnp.max(masked, axis=1, keepdims=True)
        e = jnp.exp(masked - m)                 # off-edge entries underflow to exact 0
        s = jnp.sum(e, axis=1, keepdims=True)   # >= 1 whenever the row has an edge
        inv = pl.reciprocal(s, approx=True)     # EUP, not VALU div
        # Rows with no in-edges (m == MASK_VAL): zero the whole row (matches PyG).
        inv = jnp.where(m > jnp.float32(NO_EDGE_THRESH), inv, 0.0)
        att = (e * inv).astype(jnp.bfloat16)    # bf16 feed -> native-rate MXU
        out_ref[:, hd * d:(hd + 1) * d] = jnp.dot(
            att, h[:, hd * d:(hd + 1) * d], preferred_element_type=jnp.float32)

    y = out_ref[...] + b_ref[...]
    if activation == "elu":
        # min() keeps the unselected exp branch finite.
        out_ref[...] = jnp.where(y > 0, y, jnp.exp(jnp.minimum(y, 0.0)) - 1.0)
    else:  # "log_softmax" over the class (lane) axis
        m2 = jnp.max(y, axis=1, keepdims=True)
        z = y - m2
        out_ref[...] = z - jnp.log(jnp.sum(jnp.exp(z), axis=1, keepdims=True))


def gat_layer(x, adj_i8, w, asrc, adst, bias, *, heads, d, activation, vmem_limit):
    n, fin = x.shape
    hd_dim = heads * d
    asrc_t = jnp.transpose(_block_diag(asrc, heads, d))     # (H, H*D)
    adst_bd = _block_diag(adst, heads, d)                   # (H*D, H)
    x_b = x.astype(jnp.bfloat16)
    w_b = w.astype(jnp.bfloat16)

    cparams = pltpu.CompilerParams(dimension_semantics=("parallel",),
                                   vmem_limit_bytes=vmem_limit)

    # ---- shared per-layer work: projection + all-head score matmuls (row-tiled) ----
    tp = _pick_proj_tile(n)
    h, asrc_all, adst_all = pl.pallas_call(
        gat_project_kernel,
        out_shape=(jax.ShapeDtypeStruct((n, hd_dim), jnp.bfloat16),
                   jax.ShapeDtypeStruct((heads, n), jnp.float32),
                   jax.ShapeDtypeStruct((n, heads), jnp.float32)),
        grid=(n // tp,),
        in_specs=[
            pl.BlockSpec((tp, fin), lambda i: (i, 0)),        # x: row block (bf16)
            pl.BlockSpec((fin, hd_dim), lambda i: (0, 0)),    # W: resident
            pl.BlockSpec((heads, hd_dim), lambda i: (0, 0)),  # att_src^T: resident
            pl.BlockSpec((hd_dim, heads), lambda i: (0, 0)),  # att_dst: resident
        ],
        out_specs=(pl.BlockSpec((tp, hd_dim), lambda i: (i, 0)),
                   pl.BlockSpec((heads, tp), lambda i: (0, i)),
                   pl.BlockSpec((tp, heads), lambda i: (i, 0))),
        compiler_params=cparams,
    )(x_b, w_b, asrc_t, adst_bd)

    # ---- attention: masked softmax over incoming edges + PV matmul, per row block ----
    tm = _pick_attn_tile(n, heads, hd_dim, vmem_limit)
    kernel = functools.partial(gat_attn_kernel, heads=heads, d=d,
                               activation=activation)
    # TODO(synk): mark the never-changing resident blocks (h, a_src, bias) with
    # pipeline_mode=pl.Buffered(1) (and adj with Buffered(3)) once profiled.
    # TODO(synk): layer-1 output is (tm, 64) (<128 lanes -> masked writeback
    # stores); pad H*D to 128 lanes if the store epilogue ever shows in profiles.
    return pl.pallas_call(
        kernel,
        out_shape=jax.ShapeDtypeStruct((n, hd_dim), jnp.float32),
        grid=(n // tm,),
        in_specs=[
            pl.BlockSpec((n, hd_dim), lambda i: (0, 0)),   # h: resident (bf16)
            pl.BlockSpec((heads, n), lambda i: (0, 0)),    # a_src^T: resident
            pl.BlockSpec((tm, heads), lambda i: (i, 0)),   # a_dst: row block
            pl.BlockSpec((tm, n), lambda i: (i, 0)),       # adj: row block (int8 stream)
            pl.BlockSpec((1, hd_dim), lambda i: (0, 0)),   # bias: resident
        ],
        out_specs=pl.BlockSpec((tm, hd_dim), lambda i: (i, 0)),
        compiler_params=cparams,
    )(h, asrc_all, adst_all, adj_i8, bias)


def gatnet_forward(x, adj, params, *, heads1=8, d1=8):
    n_real = x.shape[0]
    C = params["w2"].shape[1]
    vmem_limit = _vmem_limit_bytes()

    # NOTE: inference mode -> both F.dropout calls and attention dropout are identity.

    # Pad the node count to a grid/lane friendly multiple.  Padded rows/columns
    # have no edges, so they never influence real nodes; sliced off at the end.
    mult = 128 if n_real >= 128 else 8
    n = ((n_real + mult - 1) // mult) * mult
    if n != n_real:
        x = jnp.zeros((n, x.shape[1]), x.dtype).at[:n_real].set(x)
        adj = jnp.zeros((n, n), adj.dtype).at[:n_real, :n_real].set(adj)
    adj_i8 = (adj > 0).astype(jnp.int8)   # 0/1 mask: 4x smaller than f32 to stream

    # ---- GATConv 1: in=F, out=8, heads=8, concat=True, then F.elu ----
    h1 = gat_layer(x, adj_i8, params["w1"], params["asrc1"], params["adst1"],
                   params["b1"], heads=heads1, d=d1, activation="elu",
                   vmem_limit=vmem_limit)

    # ---- GATConv 2: in=64, out=C, heads=1, concat=False, then log_softmax ----
    # Pad the class dim to a lane-friendly width (zero weights / -1e30 bias on the
    # padded logits leave the real-class log-softmax unchanged); slice afterwards.
    hid = heads1 * d1
    c_pad = ((C + 127) // 128) * 128
    w2p = jnp.zeros((hid, c_pad), jnp.float32).at[:, :C].set(params["w2"])
    asrc2p = jnp.zeros((1, c_pad), jnp.float32).at[:, :C].set(params["asrc2"])
    adst2p = jnp.zeros((1, c_pad), jnp.float32).at[:, :C].set(params["adst2"])
    b2p = jnp.full((1, c_pad), MASK_VAL, jnp.float32).at[:, :C].set(params["b2"])
    out_p = gat_layer(h1, adj_i8, w2p, asrc2p, adst2p, b2p,
                      heads=1, d=c_pad, activation="log_softmax",
                      vmem_limit=vmem_limit)
    return out_p[:n_real, :C]


def gatnet_reference(x, adj, params, *, heads1=8, d1=8):
    """Pure-JAX reference mirroring the same dense-GAT math (f32, exact div)."""
    hp = lax.Precision.HIGHEST

    def head(h, a_src_row, a_dst_row, lo, d):
        h_hd = h[:, lo:lo + d]
        a_s = jnp.sum(h_hd * a_src_row, axis=-1)
        a_d = jnp.sum(h_hd * a_dst_row, axis=-1)
        logits = a_d[:, None] + a_s[None, :]
        logits = jnp.where(logits > 0, logits, NEG_SLOPE * logits)
        masked = jnp.where(adj > 0, logits, MASK_VAL)
        m = jnp.max(masked, axis=1, keepdims=True)
        e = jnp.where(adj > 0, jnp.exp(masked - m), 0.0)
        s = jnp.sum(e, axis=1, keepdims=True)
        att = e / jnp.maximum(s, 1e-16)
        return jnp.dot(att, h_hd, precision=hp)

    h = jnp.dot(x, params["w1"], precision=hp)
    h1 = jnp.concatenate(
        [head(h, params["asrc1"][i:i + 1], params["adst1"][i:i + 1], i * d1, d1)
         for i in range(heads1)], axis=1) + params["b1"]
    h1 = jnp.where(h1 > 0, h1, jnp.exp(h1) - 1.0)
    h2 = jnp.dot(h1, params["w2"], precision=hp)
    C = params["w2"].shape[1]
    out2 = head(h2, params["asrc2"], params["adst2"], 0, C) + params["b2"]
    return jax.nn.log_softmax(out2, axis=1)


if __name__ == "__main__":
    N, F_IN, C, E = 256, 32, 7, 1024   # nodes, num_feats, num_classes, edges

    key = jax.random.PRNGKey(0)
    kx, ks, kd, k1, k2, k3, k4, k5, k6 = jax.random.split(key, 9)

    def glorot(k, shape):
        fan_in, fan_out = shape[0], shape[-1]
        lim = (6.0 / (fan_in + fan_out)) ** 0.5
        return jax.random.uniform(k, shape, jnp.float32, -lim, lim)

    # GATConv1: Linear(F_IN -> 8*8), att_src/att_dst (heads=8, out=8), bias (64,)
    # GATConv2: Linear(64 -> C),    att_src/att_dst (heads=1, out=C), bias (C,)
    params = {
        "w1": glorot(k1, (F_IN, 8 * 8)),
        "asrc1": glorot(k2, (8, 8)),
        "adst1": glorot(k3, (8, 8)),
        "b1": jnp.zeros((1, 8 * 8), jnp.float32),   # reset_parameters() zeros bias
        "w2": glorot(k4, (8 * 8, C)),
        "asrc2": glorot(k5, (1, C)),
        "adst2": glorot(k6, (1, C)),
        "b2": jnp.zeros((1, C), jnp.float32),
    }

    x = jax.random.normal(kx, (N, F_IN), jnp.float32)
    src = jax.random.randint(ks, (E,), 0, N)
    dst = jax.random.randint(kd, (E,), 0, N)
    adj = jnp.zeros((N, N), jnp.float32).at[dst, src].set(1.0)  # adj[i, j]=1 iff edge j->i

    out = gatnet_forward(x, adj, params)
    out = jax.block_until_ready(out)

    assert out.shape == (N, C)
    assert bool(jnp.all(jnp.isfinite(out)))
    # The kernel feeds the MXU bf16 (x, W, h, att per the perf review) with f32
    # accumulation, while the reference runs f32 HIGHEST -> widen the tolerance
    # accordingly (observed error is ~1e-2 worst case, well inside 5e-2).
    ref = gatnet_reference(x, adj, params)
    np.testing.assert_allclose(np.asarray(out), np.asarray(ref), atol=5e-2, rtol=5e-2)

    print("KERNEL_OK")
</pallas_src>

<mosaic_0001>
module attributes {stable_mosaic.version = 11 : i64} {
  func.func @gat_project_kernel(%arg0: i32, %arg1: memref<128x32xbf16, #tpu.memory_space<vmem>>, %arg2: memref<32x64xbf16, #tpu.memory_space<vmem>>, %arg3: memref<8x64xf32, #tpu.memory_space<vmem>>, %arg4: memref<64x8xf32, #tpu.memory_space<vmem>>, %arg5: memref<128x64xbf16, #tpu.memory_space<vmem>>, %arg6: memref<8x128xf32, #tpu.memory_space<vmem>>, %arg7: memref<128x8xf32, #tpu.memory_space<vmem>>) attributes {dimension_semantics = [#tpu.dimension_semantics<parallel>], iteration_bounds = array<i64: 2>, scalar_prefetch = 0 : i64, scratch_operands = 0 : i64, tpu.core_type = #tpu.core_type<tc>, window_params = [{transform_indices = @transform_0, window_bounds = array<i64: 128, 32>}, {pipeline_mode = #tpu.pipeline_mode<synchronous>, transform_indices = @transform_1, window_bounds = array<i64: 32, 64>}, {pipeline_mode = #tpu.pipeline_mode<synchronous>, transform_indices = @transform_2, window_bounds = array<i64: 8, 64>}, {pipeline_mode = #tpu.pipeline_mode<synchronous>, transform_indices = @transform_3, window_bounds = array<i64: 64, 8>}, {transform_indices = @transform_4, window_bounds = array<i64: 128, 64>}, {transform_indices = @transform_5, window_bounds = array<i64: 8, 128>}, {transform_indices = @transform_6, window_bounds = array<i64: 128, 8>}]} {
    %c0 = arith.constant 0 : index
    %c0_0 = arith.constant 0 : index
    %0 = vector.load %arg1[%c0, %c0_0] : memref<128x32xbf16, #tpu.memory_space<vmem>>, vector<128x32xbf16>
    %c0_1 = arith.constant 0 : index
    %c0_2 = arith.constant 0 : index
    %1 = vector.load %arg2[%c0_1, %c0_2] : memref<32x64xbf16, #tpu.memory_space<vmem>>, vector<32x64xbf16>
    %cst = arith.constant dense<0.000000e+00> : vector<128x64xf32>
    %2 = tpu.matmul %0, %1, %cst {dimension_numbers = #tpu.dot_dimension_numbers<[1], [0], [0], [1], [0, 0, 1, 1], [], []>} : vector<128x32xbf16>, vector<32x64xbf16>, vector<128x64xf32> -> vector<128x64xf32>
    %3 = arith.truncf %2 : vector<128x64xf32> to vector<128x64xbf16>
    %c0_3 = arith.constant 0 : index
    %c0_4 = arith.constant 0 : index
    %4 = vector.load %arg5[%c0_3, %c0_4] : memref<128x64xbf16, #tpu.memory_space<vmem>>, vector<128x64xbf16>
    tpu.vector_store %arg5[%c0_3, %c0_4], %3 {strides = array<i32>} : memref<128x64xbf16, #tpu.memory_space<vmem>>, vector<128x64xbf16>,
    %c0_5 = arith.constant 0 : index
    %c0_6 = arith.constant 0 : index
    %5 = vector.load %arg3[%c0_5, %c0_6] : memref<8x64xf32, #tpu.memory_space<vmem>>, vector<8x64xf32>
    %cst_7 = arith.constant dense<0.000000e+00> : vector<8x128xf32>
    %6 = tpu.matmul %5, %2, %cst_7 {dimension_numbers = #tpu.dot_dimension_numbers<[1], [1], [0], [0], [0, 0, 1, 0], [], []>} : vector<8x64xf32>, vector<128x64xf32>, vector<8x128xf32> -> vector<8x128xf32>
    %c0_8 = arith.constant 0 : index
    %c0_9 = arith.constant 0 : index
    %7 = vector.load %arg6[%c0_8, %c0_9] : memref<8x128xf32, #tpu.memory_space<vmem>>, vector<8x128xf32>
    tpu.vector_store %arg6[%c0_8, %c0_9], %6 {strides = array<i32>} : memref<8x128xf32, #tpu.memory_space<vmem>>, vector<8x128xf32>,
    %c0_10 = arith.constant 0 : index
    %c0_11 = arith.constant 0 : index
    %8 = vector.load %arg4[%c0_10, %c0_11] : memref<64x8xf32, #tpu.memory_space<vmem>>, vector<64x8xf32>
    %cst_12 = arith.constant dense<0.000000e+00> : vector<128x8xf32>
    %9 = tpu.matmul %2, %8, %cst_12 {dimension_numbers = #tpu.dot_dimension_numbers<[1], [0], [0], [1], [0, 0, 1, 1], [], []>} : vector<128x64xf32>, vector<64x8xf32>, vector<128x8xf32> -> vector<128x8xf32>
    %c0_13 = arith.constant 0 : index
    %c0_14 = arith.constant 0 : index
    %10 = vector.load %arg7[%c0_13, %c0_14] : memref<128x8xf32, #tpu.memory_space<vmem>>, vector<128x8xf32>
    tpu.vector_store %arg7[%c0_13, %c0_14], %9 {strides = array<i32>} : memref<128x8xf32, #tpu.memory_space<vmem>>, vector<128x8xf32>,
    return
  }
  func.func @transform_0(%arg0: i32) -> (i32, i32) {
    %c0_i32 = arith.constant 0 : i32
    %c0_i32_0 = arith.constant 0 : i32
    return %arg0, %c0_i32 : i32, i32
  }
  func.func @transform_1(%arg0: i32) -> (i32, i32) {
    %c0_i32 = arith.constant 0 : i32
    %c0_i32_0 = arith.constant 0 : i32
    %c0_i32_1 = arith.constant 0 : i32
    return %c0_i32, %c0_i32_0 : i32, i32
  }
  func.func @transform_2(%arg0: i32) -> (i32, i32) {
    %c0_i32 = arith.constant 0 : i32
    %c0_i32_0 = arith.constant 0 : i32
    %c0_i32_1 = arith.constant 0 : i32
    return %c0_i32, %c0_i32_0 : i32, i32
  }
  func.func @transform_3(%arg0: i32) -> (i32, i32) {
    %c0_i32 = arith.constant 0 : i32
    %c0_i32_0 = arith.constant 0 : i32
    %c0_i32_1 = arith.constant 0 : i32
    return %c0_i32, %c0_i32_0 : i32, i32
  }
  func.func @transform_4(%arg0: i32) -> (i32, i32) {
    %c0_i32 = arith.constant 0 : i32
    %c0_i32_0 = arith.constant 0 : i32
    return %arg0, %c0_i32 : i32, i32
  }
  func.func @transform_5(%arg0: i32) -> (i32, i32) {
    %c0_i32 = arith.constant 0 : i32
    %c0_i32_0 = arith.constant 0 : i32
    return %c0_i32, %arg0 : i32, i32
  }
  func.func @transform_6(%arg0: i32) -> (i32, i32) {
    %c0_i32 = arith.constant 0 : i32
    %c0_i32_0 = arith.constant 0 : i32
    return %arg0, %c0_i32 : i32, i32
  }
}

</mosaic_0001>

<llo_original>
// kernel: tpu_custom_call.1
$region0: #{tpu_custom_call.1}
  #allocation0 [shape = 'u32[]', space=smem, size = 0x4, offset = 0x4, fixed_abs, tag = 'smem constant byte address 0x4 - core index']
  #allocation1 [shape = 'u32[144,128]{1,0:T(1,128)}', space=vmem, size = 0x12000, scoped, tag = 'internal scratch']
  %s0 = inlined_call_operand.vmem [shape: bf16[256,32], index: 0, kind: input, shape index: {}]
  %s1 = inlined_call_operand.vmem [shape: bf16[32,64], index: 1, kind: input, shape index: {}]
  %s2 = inlined_call_operand.vmem [shape: f32[8,64], index: 2, kind: input, shape index: {}]
  %s3 = inlined_call_operand.vmem [shape: f32[64,8], index: 3, kind: input, shape index: {}]
  %s4 = inlined_call_operand.vmem [shape: bf16[256,64], index: 4, kind: output, shape index: {0}]
  %s5 = inlined_call_operand.hbm [shape: f32[8,256], index: 5, kind: output, shape index: {1}]
  %s6 = inlined_call_operand.vmem [shape: f32[256,8], index: 6, kind: output, shape index: {2}]
  %7 = xla_tuple %s4, %s5, %s6
  %s8 = sld [smem:[#allocation0]]
  $region65: #{tpu_custom_call.1} parent=0
    _
  %s10 = ssub.s32 1, %s8
  %s11 = scalar_select 0, %s10, %s8
  $region1: #{tpu_custom_call.1} parent=0
    #allocation2 [shape = 'u8[8192]{0}', space=vmem, size = 0x2000, scoped, tag = 'output window, operand 1']
    #allocation3 [shape = 's32[2]{0}', space=sflag, size = 0x8, scoped, tag = 'scoped memory for tpu_custom_call.1']
    %12 = vsyncpa [#allocation3], 0
    %s13 = scalar_lea.sflag [#allocation3], 1
    %14 = vsyncpa %s13, 0
    loop: start=0, step=1, limit=4
    $region2: #{tpu_custom_call.1} parent=1 // loop_pre_header
      _
    $region3: #{tpu_custom_call.1} parent=1 // loop_header
      %s16 = sphi 0, %s20
      %p17 = scmp.ge.s32.totalorder %s16, 4
      %s26 = sphi 0, %s28
      %s29 = sphi 0, %s26
      %s30 = sphi 0, %s29
      %s46 = sphi 0, %s30
      %s50 = sphi 0, %s50
      %s52 = sphi 0, %s50
      %s53 = sphi 0, %s52
      %s67 = sphi 0, %s53
      %s71 = sphi 0, %s71
      %s73 = sphi 0, %s71
      %s74 = sphi 0, %s73
      %s88 = sphi 0, %s74
      %s92 = sphi 0, %s92
      %s94 = sphi 0, %s92
      %s95 = sphi 0, %s94
      %s109 = sphi 0, %s95
      %s115 = sphi 0, %s117
      %s118 = sphi 0, %s115
      %s119 = sphi 0, %s118
      %s135 = sphi 0, %s119
      %s141 = sphi 0, %s143
      %s144 = sphi 0, %s141
      %s145 = sphi 0, %s144
      %s161 = sphi 0, %s145
      %s167 = sphi 0, %s169
      %s170 = sphi 0, %s167
      %s171 = sphi 0, %s170
      %s187 = sphi 0, %s171
    $region4: #{tpu_custom_call.1} parent=1 // loop_header_branch
      %19 = sbr.rel (%p17) target = $region8
    $region5: #{tpu_custom_call.1} parent=1 // loop_body
      %s21 = ssub.s32 %s16, 1
      %s22 = ssub.s32 %s16, 2
      %s23 = sadd.s32 %s16, 1
      %s24 = ssub.s32 %s16, %s23
      %p25 = scmp.eq.s32.totalorder %s24, 0
      %s27 = sadd.s32 %s26, 1
      %s28 = scalar_select %p25, %s26, %s27
      %p31 = pneg %p25
      %p32 = scmp.eq.s32.totalorder %s16, 1
      %p33 = por %p31, %p32
      %p34 = scmp.ne.s32.totalorder %s26, %s29
      %p35 = scmp.eq.s32.totalorder %s16, 0
      %p36 = por %p34, %p35
      %p37 = scmp.ne.s32.totalorder %s26, %s29
      %p38 = scmp.eq.s32.totalorder %s21, 1
      %p39 = por %p37, %p38
      %p40 = scmp.ne.s32.totalorder %s29, %s30
      %p41 = scmp.eq.s32.totalorder %s21, 0
      %p42 = por %p40, %p41
      %p43 = scmp.ne.s32.totalorder %s29, %s30
      %p44 = scmp.eq.s32.totalorder %s22, 1
      %p45 = por %p43, %p44
      %p47 = scmp.ne.s32.totalorder %s30, %s46
      %p48 = scmp.eq.s32.totalorder %s22, 0
      %p49 = por %p47, %p48
      %s51 = sadd.s32 %s50, 1
      %p54 = scmp.eq.s32.totalorder %s16, 1
      %p55 = scmp.ne.s32.totalorder %s50, %s52
      %p56 = scmp.eq.s32.totalorder %s16, 0
      %p57 = por %p55, %p56
      %p58 = scmp.ne.s32.totalorder %s50, %s52
      %p59 = scmp.eq.s32.totalorder %s21, 1
      %p60 = por %p58, %p59
      %p61 = scmp.ne.s32.totalorder %s52, %s53
      %p62 = scmp.eq.s32.totalorder %s21, 0
      %p63 = por %p61, %p62
      %p64 = scmp.ne.s32.totalorder %s52, %s53
      %p65 = scmp.eq.s32.totalorder %s22, 1
      %p66 = por %p64, %p65
      %p68 = scmp.ne.s32.totalorder %s53, %s67
      %p69 = scmp.eq.s32.totalorder %s22, 0
      %p70 = por %p68, %p69
      %s72 = sadd.s32 %s71, 1
      %p75 = scmp.eq.s32.totalorder %s16, 1
      %p76 = scmp.ne.s32.totalorder %s71, %s73
      %p77 = scmp.eq.s32.totalorder %s16, 0
      %p78 = por %p76, %p77
      %p79 = scmp.ne.s32.totalorder %s71, %s73
      %p80 = scmp.eq.s32.totalorder %s21, 1
      %p81 = por %p79, %p80
      %p82 = scmp.ne.s32.totalorder %s73, %s74
      %p83 = scmp.eq.s32.totalorder %s21, 0
      %p84 = por %p82, %p83
      %p85 = scmp.ne.s32.totalorder %s73, %s74
      %p86 = scmp.eq.s32.totalorder %s22, 1
      %p87 = por %p85, %p86
      %p89 = scmp.ne.s32.totalorder %s74, %s88
      %p90 = scmp.eq.s32.totalorder %s22, 0
      %p91 = por %p89, %p90
      %s93 = sadd.s32 %s92, 1
      %p96 = scmp.eq.s32.totalorder %s16, 1
      %p97 = scmp.ne.s32.totalorder %s92, %s94
      %p98 = scmp.eq.s32.totalorder %s16, 0
      %p99 = por %p97, %p98
      %p100 = scmp.ne.s32.totalorder %s92, %s94
      %p101 = scmp.eq.s32.totalorder %s21, 1
      %p102 = por %p100, %p101
      %p103 = scmp.ne.s32.totalorder %s94, %s95
      %p104 = scmp.eq.s32.totalorder %s21, 0
      %p105 = por %p103, %p104
      %p106 = scmp.ne.s32.totalorder %s94, %s95
      %p107 = scmp.eq.s32.totalorder %s22, 1
      %p108 = por %p106, %p107
      %p110 = scmp.ne.s32.totalorder %s95, %s109
      %p111 = scmp.eq.s32.totalorder %s22, 0
      %p112 = por %p110, %p111
      %s113 = ssub.s32 %s16, %s23
      %p114 = scmp.eq.s32.totalorder %s113, 0
      %s116 = sadd.s32 %s115, 1
      %s117 = scalar_select %p114, %s115, %s116
      %p120 = pneg %p114
      %p121 = scmp.eq.s32.totalorder %s16, 1
      %p122 = por %p120, %p121
      %p123 = scmp.ne.s32.totalorder %s115, %s118
      %p124 = scmp.eq.s32.totalorder %s16, 0
      %p125 = por %p123, %p124
      %p126 = scmp.ne.s32.totalorder %s115, %s118
      %p127 = scmp.eq.s32.totalorder %s21, 1
      %p128 = por %p126, %p127
      %p129 = scmp.ne.s32.totalorder %s118, %s119
      %p130 = scmp.eq.s32.totalorder %s21, 0
      %p131 = por %p129, %p130
      %p132 = scmp.ne.s32.totalorder %s118, %s119
      %p133 = scmp.eq.s32.totalorder %s22, 1
      %p134 = por %p132, %p133
      %p136 = scmp.ne.s32.totalorder %s119, %s135
      %p137 = scmp.eq.s32.totalorder %s22, 0
      %p138 = por %p136, %p137
      %s139 = ssub.s32 %s16, %s23
      %p140 = scmp.eq.s32.totalorder %s139, 0
      %s142 = sadd.s32 %s141, 1
      %s143 = scalar_select %p140, %s141, %s142
      %p146 = pneg %p140
      %p147 = scmp.eq.s32.totalorder %s16, 1
      %p148 = por %p146, %p147
      %p149 = scmp.ne.s32.totalorder %s141, %s144
      %p150 = scmp.eq.s32.totalorder %s16, 0
      %p151 = por %p149, %p150
      %p152 = scmp.ne.s32.totalorder %s141, %s144
      %p153 = scmp.eq.s32.totalorder %s21, 1
      %p154 = por %p152, %p153
      %p155 = scmp.ne.s32.totalorder %s144, %s145
      %p156 = scmp.eq.s32.totalorder %s21, 0
      %p157 = por %p155, %p156
      %p158 = scmp.ne.s32.totalorder %s144, %s145
      %p159 = scmp.eq.s32.totalorder %s22, 1
      %p160 = por %p158, %p159
      %p162 = scmp.ne.s32.totalorder %s145, %s161
      %p163 = scmp.eq.s32.totalorder %s22, 0
      %p164 = por %p162, %p163
      %s165 = ssub.s32 %s16, %s23
      %p166 = scmp.eq.s32.totalorder %s165, 0
      %s168 = sadd.s32 %s167, 1
      %s169 = scalar_select %p166, %s167, %s168
      %p172 = pneg %p166
      %p173 = scmp.eq.s32.totalorder %s16, 1
      %p174 = por %p172, %p173
      %p175 = scmp.ne.s32.totalorder %s167, %s170
      %p176 = scmp.eq.s32.totalorder %s16, 0
      %p177 = por %p175, %p176
      %p178 = scmp.ne.s32.totalorder %s167, %s170
      %p179 = scmp.eq.s32.totalorder %s21, 1
      %p180 = por %p178, %p179
      %p181 = scmp.ne.s32.totalorder %s170, %s171
      %p182 = scmp.eq.s32.totalorder %s21, 0
      %p183 = por %p181, %p182
      %p184 = scmp.ne.s32.totalorder %s170, %s171
      %p185 = scmp.eq.s32.totalorder %s22, 1
      %p186 = por %p184, %p185
      %p188 = scmp.ne.s32.totalorder %s171, %s187
      %p189 = scmp.eq.s32.totalorder %s22, 0
      %p190 = por %p188, %p189
      %p191 = scmp.le.s32.totalorder 1, %s16
      %p192 = scmp.lt.s32.totalorder %s16, 3
      %p193 = pnand %p191, %p192
      %p194 = pneg %p193
      // Predicated region
      $region9: #{tpu_custom_call.1} parent=5 // pred_check
        _
      $region10: #{tpu_custom_call.1} parent=5 // pred_check_branch
        %196 = sbr.rel (%p193) target = $region12
      $region11: #{tpu_custom_call.1} parent=5 // pred_region
        %s197 = ssub.s32 %s16, 1
        // Predicated region
        $region13: #{tpu_custom_call.1} parent=11 // pred_check
          %p198 = pneg %p63
        $region14: #{tpu_custom_call.1} parent=11 // pred_check_branch
          %200 = sbr.rel (%p198) target = $region16
        $region15: #{tpu_custom_call.1} parent=11 // pred_region
          _
        $region16: #{tpu_custom_call.1} parent=11 // pred_fallthru
          _
        // Predicated region
        $region17: #{tpu_custom_call.1} parent=11 // pred_check
          %p201 = pneg %p84
        $region18: #{tpu_custom_call.1} parent=11 // pred_check_branch
          %203 = sbr.rel (%p201) target = $region20
        $region19: #{tpu_custom_call.1} parent=11 // pred_region
          _
        $region20: #{tpu_custom_call.1} parent=11 // pred_fallthru
          _
        // Predicated region
        $region21: #{tpu_custom_call.1} parent=11 // pred_check
          %p204 = pneg %p105
        $region22: #{tpu_custom_call.1} parent=11 // pred_check_branch
          %206 = sbr.rel (%p204) target = $region24
        $region23: #{tpu_custom_call.1} parent=11 // pred_region
          _
        $region24: #{tpu_custom_call.1} parent=11 // pred_fallthru
          _
      $region12: #{tpu_custom_call.1} parent=5 // pred_fallthru
        _
      %p207 = scmp.lt.s32.totalorder %s16, 2
      // Predicated region
      $region25: #{tpu_custom_call.1} parent=5 // pred_check
        %p208 = pneg %p207
      $region26: #{tpu_custom_call.1} parent=5 // pred_check_branch
        %210 = sbr.rel (%p208) target = $region28
      $region27: #{tpu_custom_call.1} parent=5 // pred_region
        // Predicated region
        $region29: #{tpu_custom_call.1} parent=27 // pred_check
          %p211 = pneg %p36
        $region30: #{tpu_custom_call.1} parent=27 // pred_check_branch
          %213 = sbr.rel (%p211) target = $region32
        $region31: #{tpu_custom_call.1} parent=27 // pred_region
          %s214 = smul.u32 16, %s16
          %p215 = scmp.lt.s32.totalorder %s214, 31
          %s216 = scalar_select %p215, %s214, 31
          %s217 = smul.addr %s216, 4
          %s218 = scalar_lea.vmem %s0, %s217
          %s219 = smul.u32 16, %s16
        $region32: #{tpu_custom_call.1} parent=27 // pred_fallthru
          _
      $region28: #{tpu_custom_call.1} parent=5 // pred_fallthru
        _
      %p220 = scmp.le.s32.totalorder 1, %s16
      %p221 = scmp.lt.s32.totalorder %s16, 3
      %p222 = pnand %p220, %p221
      %p223 = pneg %p222
      // Predicated region
      $region33: #{tpu_custom_call.1} parent=5 // pred_check
        _
      $region34: #{tpu_custom_call.1} parent=5 // pred_check_branch
        %225 = sbr.rel (%p222) target = $region36
      $region35: #{tpu_custom_call.1} parent=5 // pred_region
        %s226 = ssub.s32 %s16, 1
        %s227 = smul.u32 16, %s21
        %p228 = scmp.lt.s32.totalorder %s227, 31
        %s229 = scalar_select %p228, %s227, 31
        %s230 = smul.addr %s229, 4
        %s231 = scalar_lea.vmem %s0, %s230
        %p232 = pneg %p42
        %p233 = pneg %p39
        %p234 = pneg %p63
        %p235 = pneg %p60
        %p236 = pneg %p84
        %p237 = pneg %p81
        %p238 = pneg %p105
        %p239 = pneg %p102
        %p240 = pneg %p131
        %p241 = pneg %p128
        %s242 = smul.u32 16, %s21
        %p243 = scmp.lt.s32.totalorder %s242, 31
        %s244 = scalar_select %p243, %s242, 31
        %s245 = smul.addr %s244, 4
        %s246 = scalar_lea.vmem %s4, %s245
        %p247 = pneg %p157
        %p248 = pneg %p154
        %s249 = sand.u32 %s144, 1
        %s250 = scalar_lea.sflag [#allocation3], %s249
        %s251 = sand.u32 %s144, 1
        %s252 = smul.addr %s251, 8
        %s253 = scalar_lea.vmem [#allocation2], %s252
        %p254 = pneg %p183
        %p255 = pneg %p180
        %s256 = smul.u32 16, %s21
        %p257 = scmp.lt.s32.totalorder %s256, 31
        %s258 = scalar_select %p257, %s256, 31
        %s259 = smul.addr %s258, 8
        %s260 = scalar_lea.vmem %s6, %s259
        %s261 = smul.u32 16, %s21
        %p262 = scmp.lt.s32.totalorder %s261, 31
        %s263 = scalar_select %p262, %s261, 31
        %s264 = smul.addr %s263, 4
        %s265 = scalar_lea.vmem %s0, %s264
        %s266 = smul.u32 16, %s21
        %s267 = smul.u32 16, %s21
        %p268 = scmp.lt.s32.totalorder %s267, 31
        %s269 = scalar_select %p268, %s267, 31
        %s270 = smul.addr %s269, 4
        %s271 = scalar_lea.vmem %s4, %s270
        %s272 = smul.u32 16, %s21
        %s273 = smul.u32 16, %s21
        %p274 = scmp.lt.s32.totalorder %s273, 31
        %s275 = scalar_select %p274, %s273, 31
        %s276 = smul.addr %s275, 8
        %s277 = scalar_lea.vmem %s6, %s276
        %s278 = smul.u32 16, %s21
        %v280 = vld [vmem:[%s265] sm:$0xf]
        %v281 = vld [vmem:[%s265 + $0x4] sm:$0xf]
        %v282 = vld [vmem:[%s265 + $0x8] sm:$0xf]
        %v283 = vld [vmem:[%s265 + $0xc] sm:$0xf]
        %v284 = vld [vmem:[%s265 + $0x10] sm:$0xf]
        %v285 = vld [vmem:[%s265 + $0x14] sm:$0xf]
        %v286 = vld [vmem:[%s265 + $0x18] sm:$0xf]
        %v287 = vld [vmem:[%s265 + $0x1c] sm:$0xf]
        %v288 = vld [vmem:[%s265 + $0x20] sm:$0xf]
        %v289 = vld [vmem:[%s265 + $0x24] sm:$0xf]
        %v290 = vld [vmem:[%s265 + $0x28] sm:$0xf]
        %v291 = vld [vmem:[%s265 + $0x2c] sm:$0xf]
        %v292 = vld [vmem:[%s265 + $0x30] sm:$0xf]
        %v293 = vld [vmem:[%s265 + $0x34] sm:$0xf]
        %v294 = vld [vmem:[%s265 + $0x38] sm:$0xf]
        %v295 = vld [vmem:[%s265 + $0x3c] sm:$0xf]
        %v296 = vld [vmem:[%s1] sm:$0xf]
        %v297 = vld [vmem:[%s1 + $0x4] sm:$0xf]
        %v298 = vld [vmem:[%s1 + $0x8] sm:$0xf]
        %v299 = vld [vmem:[%s1 + $0xc] sm:$0xf]
        %v316 = vunpack.c.l.b16 %v280
        %v317 = vunpack.c.l.b16 %v281
        %v318 = vunpack.c.l.b16 %v282
        %v319 = vunpack.c.l.b16 %v283
        %v320 = vunpack.c.l.b16 %v284
        %v321 = vunpack.c.l.b16 %v285
        %v322 = vunpack.c.l.b16 %v286
        %v323 = vunpack.c.l.b16 %v287
        %v324 = vunpack.c.l.b16 %v288
        %v325 = vunpack.c.l.b16 %v289
        %v326 = vunpack.c.l.b16 %v290
        %v327 = vunpack.c.l.b16 %v291
        %v328 = vunpack.c.l.b16 %v292
        %v329 = vunpack.c.l.b16 %v293
        %v330 = vunpack.c.l.b16 %v294
        %v331 = vunpack.c.l.b16 %v295
        %v332 = vpack.c.b16 %v317, %v316
        %v333 = vpack.c.b16 %v319, %v318
        %v334 = vpack.c.b16 %v321, %v320
        %v335 = vpack.c.b16 %v323, %v322
        %v336 = vpack.c.b16 %v325, %v324
        %v337 = vpack.c.b16 %v327, %v326
        %v338 = vpack.c.b16 %v329, %v328
        %v339 = vpack.c.b16 %v331, %v330
        %v344 = vunpack.c.l.b16 %v296
        %v345 = vunpack.c.l.b16 %v297
        %v346 = vunpack.c.l.b16 %v298
        %v347 = vunpack.c.l.b16 %v299
        %v348 = vpack.c.b16 %v345, %v344
        %v349 = vpack.c.b16 %v347, %v346
        %vm352 = vcmask 261120
        %v354 = vsel %vm352, %v332, 0
        %v357 = vsel %vm352, %v333, 0
        %v360 = vsel %vm352, %v334, 0
        %v363 = vsel %vm352, %v335, 0
        %v366 = vsel %vm352, %v336, 0
        %v369 = vsel %vm352, %v337, 0
        %v372 = vsel %vm352, %v338, 0
        %v375 = vsel %vm352, %v339, 0
        %377 = vmatprep.subr.bf16.mxu0 0
        %378 = vmatpush1.bf16.msra.mxu0 0
        %379 = vmatprep.subr.bf16.mxu0 0
        %380 = vmatpush1.bf16.msra.mxu0 0
        %381 = vmatprep.subr.bf16.mxu0 0
        %382 = vmatpush1.bf16.msra.mxu0 0
        %383 = vmatprep.subr.bf16.mxu0 0
        %384 = vmatpush1.bf16.msra.mxu0 0
        %385 = vmatprep.subr.bf16.mxu0 0
        %386 = vmatpush1.bf16.msra.mxu0 0
        %387 = vmatprep.subr.bf16.mxu0 0
        %388 = vmatpush1.bf16.msra.mxu0 0
        %389 = vmatprep.subr.bf16.mxu0 0
        %390 = vmatpush1.bf16.msra.mxu0 %v349
        %391 = vmatprep.subr.bf16.mxu0 0
        %392 = vmatpush1.bf16.msra.mxu0 %v348
        %393 = vmatprep.subr.bf16.mxu0 0
        %394 = vmatpush2.bf16.msra.mxu0 0
        %395 = vmatprep.subr.bf16.mxu0 0
        %396 = vmatpush2.bf16.msra.mxu0 0
        %397 = vmatprep.subr.bf16.mxu0 0
        %398 = vmatpush2.bf16.msra.mxu0 0
        %399 = vmatprep.subr.bf16.mxu0 0
        %400 = vmatpush2.bf16.msra.mxu0 0
        %401 = vmatprep.subr.bf16.mxu0 0
        %402 = vmatpush2.bf16.msra.mxu0 0
        %403 = vmatprep.subr.bf16.mxu0 0
        %404 = vmatpush2.bf16.msra.mxu0 0
        %405 = vmatprep.subr.bf16.mxu0 0
        %406 = vmatpush2.bf16.msra.mxu0 0
        %407 = vmatprep.subr.bf16.mxu0 0
        %408 = vmatpush2.bf16.msra.mxu0 0
        %409 = vmatprep.mubr.bf16.mxu0 0
        %410 = vmatmul.mubr.bf16.gmra.mxu0 %v354
        %v411 = vpop.f32.mrf.mxu0
        %v412 = vadd.f32 0.0, %v411
        %v413 = vpop.f32.mrf.mxu0
        %v414 = vpop.f32.mrf.mxu0
        %v415 = vadd.f32 0.0, %v414
        %v416 = vpop.f32.mrf.mxu0
        %417 = vmatprep.mubr.bf16.mxu0 0
        %418 = vmatmul.mubr.bf16.gmra.mxu0 %v357
        %v419 = vpop.f32.mrf.mxu0
        %v420 = vadd.f32 0.0, %v419
        %v421 = vpop.f32.mrf.mxu0
        %v422 = vpop.f32.mrf.mxu0
        %v423 = vadd.f32 0.0, %v422
        %v424 = vpop.f32.mrf.mxu0
        %425 = vmatprep.mubr.bf16.mxu0 0
        %426 = vmatmul.mubr.bf16.gmra.mxu0 %v360
        %v427 = vpop.f32.mrf.mxu0
        %v428 = vadd.f32 0.0, %v427
        %v429 = vpop.f32.mrf.mxu0
        %v430 = vpop.f32.mrf.mxu0
        %v431 = vadd.f32 0.0, %v430
        %v432 = vpop.f32.mrf.mxu0
        %433 = vmatprep.mubr.bf16.mxu0 0
        %434 = vmatmul.mubr.bf16.gmra.mxu0 %v363
        %v435 = vpop.f32.mrf.mxu0
        %v436 = vadd.f32 0.0, %v435
        %v437 = vpop.f32.mrf.mxu0
        %v438 = vpop.f32.mrf.mxu0
        %v439 = vadd.f32 0.0, %v438
        %v440 = vpop.f32.mrf.mxu0
        %441 = vmatprep.mubr.bf16.mxu0 0
        %442 = vmatmul.mubr.bf16.gmra.mxu0 %v366
        %v443 = vpop.f32.mrf.mxu0
        %v444 = vadd.f32 0.0, %v443
        %v445 = vpop.f32.mrf.mxu0
        %v446 = vpop.f32.mrf.mxu0
        %v447 = vadd.f32 0.0, %v446
        %v448 = vpop.f32.mrf.mxu0
        %449 = vmatprep.mubr.bf16.mxu0 0
        %450 = vmatmul.mubr.bf16.gmra.mxu0 %v369
        %v451 = vpop.f32.mrf.mxu0
        %v452 = vadd.f32 0.0, %v451
        %v453 = vpop.f32.mrf.mxu0
        %v454 = vpop.f32.mrf.mxu0
        %v455 = vadd.f32 0.0, %v454
        %v456 = vpop.f32.mrf.mxu0
        %457 = vmatprep.mubr.bf16.mxu0 0
        %458 = vmatmul.mubr.bf16.gmra.mxu0 %v372
        %v459 = vpop.f32.mrf.mxu0
        %v460 = vadd.f32 0.0, %v459
        %v461 = vpop.f32.mrf.mxu0
        %v462 = vpop.f32.mrf.mxu0
        %v463 = vadd.f32 0.0, %v462
        %v464 = vpop.f32.mrf.mxu0
        %465 = vmatprep.mubr.bf16.mxu0 0
        %466 = vmatmul.mubr.bf16.gmra.mxu0 %v375
        %v467 = vpop.f32.mrf.mxu0
        %v468 = vadd.f32 0.0, %v467
        %v469 = vpop.f32.mrf.mxu0
        %v470 = vpop.f32.mrf.mxu0
        %v471 = vadd.f32 0.0, %v470
        %v472 = vpop.f32.mrf.mxu0
        %473 = vdwg.mxu0
        %v474 = vpack.c.bf16 %v415, %v412
        %v475 = vpack.c.bf16 %v423, %v420
        %v476 = vpack.c.bf16 %v431, %v428
        %v477 = vpack.c.bf16 %v439, %v436
        %v478 = vpack.c.bf16 %v447, %v444
        %v479 = vpack.c.bf16 %v455, %v452
        %v480 = vpack.c.bf16 %v463, %v460
        %v481 = vpack.c.bf16 %v471, %v468
        %v490 = vunpack.c.l.b16 %v474
        %v491 = vunpack.c.h.b16 %v474
        %v492 = vunpack.c.l.b16 %v475
        %v493 = vunpack.c.h.b16 %v475
        %v494 = vunpack.c.l.b16 %v476
        %v495 = vunpack.c.h.b16 %v476
        %v496 = vunpack.c.l.b16 %v477
        %v497 = vunpack.c.h.b16 %v477
        %v498 = vunpack.c.l.b16 %v478
        %v499 = vunpack.c.h.b16 %v478
        %v500 = vunpack.c.l.b16 %v479
        %v501 = vunpack.c.h.b16 %v479
        %v502 = vunpack.c.l.b16 %v480
        %v503 = vunpack.c.h.b16 %v480
        %v504 = vunpack.c.l.b16 %v481
        %v505 = vunpack.c.h.b16 %v481
        %v506 = vpack.c.b16 %v490, %v490
        %v507 = vpack.c.b16 %v491, %v491
        %v508 = vpack.c.b16 %v492, %v492
        %v509 = vpack.c.b16 %v493, %v493
        %v510 = vpack.c.b16 %v494, %v494
        %v511 = vpack.c.b16 %v495, %v495
        %v512 = vpack.c.b16 %v496, %v496
        %v513 = vpack.c.b16 %v497, %v497
        %v514 = vpack.c.b16 %v498, %v498
        %v515 = vpack.c.b16 %v499, %v499
        %v516 = vpack.c.b16 %v500, %v500
        %v517 = vpack.c.b16 %v501, %v501
        %v518 = vpack.c.b16 %v502, %v502
        %v519 = vpack.c.b16 %v503, %v503
        %v520 = vpack.c.b16 %v504, %v504
        %v521 = vpack.c.b16 %v505, %v505
        %vm538 = vcmask 519168
        %539 = vst.msk [vmem:[%s271] sm:$0xf] %vm538, %v506
        %540 = vst.msk [vmem:[%s271 + $0x4] sm:$0xf] %vm538, %v507
        %541 = vst.msk [vmem:[%s271 + $0x8] sm:$0xf] %vm538, %v508
        %542 = vst.msk [vmem:[%s271 + $0xc] sm:$0xf] %vm538, %v509
        %543 = vst.msk [vmem:[%s271 + $0x10] sm:$0xf] %vm538, %v510
        %544 = vst.msk [vmem:[%s271 + $0x14] sm:$0xf] %vm538, %v511
        %545 = vst.msk [vmem:[%s271 + $0x18] sm:$0xf] %vm538, %v512
        %546 = vst.msk [vmem:[%s271 + $0x1c] sm:$0xf] %vm538, %v513
        %547 = vst.msk [vmem:[%s271 + $0x20] sm:$0xf] %vm538, %v514
        %548 = vst.msk [vmem:[%s271 + $0x24] sm:$0xf] %vm538, %v515
        %549 = vst.msk [vmem:[%s271 + $0x28] sm:$0xf] %vm538, %v516
        %550 = vst.msk [vmem:[%s271 + $0x2c] sm:$0xf] %vm538, %v517
        %551 = vst.msk [vmem:[%s271 + $0x30] sm:$0xf] %vm538, %v518
        %552 = vst.msk [vmem:[%s271 + $0x34] sm:$0xf] %vm538, %v519
        %553 = vst.msk [vmem:[%s271 + $0x38] sm:$0xf] %vm538, %v520
        %554 = vst.msk [vmem:[%s271 + $0x3c] sm:$0xf] %vm538, %v521
        %v555 = vld [vmem:[%s2] sm:$0xff]
        %vm556 = vcmask 523264
        %v558 = vsel %vm556, %v555, 0
        %v561 = vsel %vm556, %v412, 0
        %v564 = vsel %vm556, %v415, 0
        %v567 = vsel %vm556, %v420, 0
        %v570 = vsel %vm556, %v423, 0
        %v573 = vsel %vm556, %v428, 0
        %v576 = vsel %vm556, %v431, 0
        %v579 = vsel %vm556, %v436, 0
        %v582 = vsel %vm556, %v439, 0
        %v585 = vsel %vm556, %v444, 0
        %v588 = vsel %vm556, %v447, 0
        %v591 = vsel %vm556, %v452, 0
        %v594 = vsel %vm556, %v455, 0
        %v597 = vsel %vm556, %v460, 0
        %v600 = vsel %vm556, %v463, 0
        %v603 = vsel %vm556, %v468, 0
        %v606 = vsel %vm556, %v471, 0
        %608 = vmatprep.subr.mxu0 0.0
        %609 = vmatpush1.xpose.msra.mxu0 %v606
        %610 = vmatprep.subr.mxu0 0.0
        %611 = vmatpush1.xpose.msra.mxu0 %v603
        %612 = vmatprep.subr.mxu0 0.0
        %613 = vmatpush1.xpose.msra.mxu0 %v600
        %614 = vmatprep.subr.mxu0 0.0
        %615 = vmatpush1.xpose.msra.mxu0 %v597
        %616 = vmatprep.subr.mxu0 0.0
        %617 = vmatpush1.xpose.msra.mxu0 %v594
        %618 = vmatprep.subr.mxu0 0.0
        %619 = vmatpush1.xpose.msra.mxu0 %v591
        %620 = vmatprep.subr.mxu0 0.0
        %621 = vmatpush1.xpose.msra.mxu0 %v588
        %622 = vmatprep.subr.mxu0 0.0
        %623 = vmatpush1.xpose.msra.mxu0 %v585
        %624 = vmatprep.subr.mxu0 0.0
        %625 = vmatpush1.xpose.msra.mxu0 %v582
        %626 = vmatprep.subr.mxu0 0.0
        %627 = vmatpush1.xpose.msra.mxu0 %v579
        %628 = vmatprep.subr.mxu0 0.0
        %629 = vmatpush1.xpose.msra.mxu0 %v576
        %630 = vmatprep.subr.mxu0 0.0
        %631 = vmatpush1.xpose.msra.mxu0 %v573
        %632 = vmatprep.subr.mxu0 0.0
        %633 = vmatpush1.xpose.msra.mxu0 %v570
        %634 = vmatprep.subr.mxu0 0.0
        %635 = vmatpush1.xpose.msra.mxu0 %v567
        %636 = vmatprep.subr.mxu0 0.0
        %637 = vmatpush1.xpose.msra.mxu0 %v564
        %638 = vmatprep.subr.mxu0 0.0
        %639 = vmatpush1.xpose.msra.mxu0 %v561
        %640 = vmatprep.subr.mxu0 0.0
        %641 = vmatpush2.xpose.msra.mxu0 0.0
        %642 = vmatprep.subr.mxu0 0.0
        %643 = vmatpush2.xpose.msra.mxu0 0.0
        %644 = vmatprep.subr.mxu0 0.0
        %645 = vmatpush2.xpose.msra.mxu0 0.0
        %646 = vmatprep.subr.mxu0 0.0
        %647 = vmatpush2.xpose.msra.mxu0 0.0
        %648 = vmatprep.subr.mxu0 0.0
        %649 = vmatpush2.xpose.msra.mxu0 0.0
        %650 = vmatprep.subr.mxu0 0.0
        %651 = vmatpush2.xpose.msra.mxu0 0.0
        %652 = vmatprep.subr.mxu0 0.0
        %653 = vmatpush2.xpose.msra.mxu0 0.0
        %654 = vmatprep.subr.mxu0 0.0
        %655 = vmatpush2.xpose.msra.mxu0 0.0
        %656 = vmatprep.subr.mxu0 0.0
        %657 = vmatpush2.xpose.msra.mxu0 0.0
        %658 = vmatprep.subr.mxu0 0.0
        %659 = vmatpush2.xpose.msra.mxu0 0.0
        %660 = vmatprep.subr.mxu0 0.0
        %661 = vmatpush2.xpose.msra.mxu0 0.0
        %662 = vmatprep.subr.mxu0 0.0
        %663 = vmatpush2.xpose.msra.mxu0 0.0
        %664 = vmatprep.subr.mxu0 0.0
        %665 = vmatpush2.xpose.msra.mxu0 0.0
        %666 = vmatprep.subr.mxu0 0.0
        %667 = vmatpush2.xpose.msra.mxu0 0.0
        %668 = vmatprep.subr.mxu0 0.0
        %669 = vmatpush2.xpose.msra.mxu0 0.0
        %670 = vmatprep.subr.mxu0 0.0
        %671 = vmatpush2.xpose.msra.mxu0 0.0
        %672 = vmatprep.mubr.f32.mxu0 0.0
        %673 = vmatmul.mubr.f32.gmra.mxu0 %v558
        %v674 = vpop.f32.mrf.mxu0
        %v675 = vadd.f32 0.0, %v674
        %v676 = vpop.f32.mrf.mxu0
        %677 = vdwg.mxu0
        %678 = vst [vmem:[%s253] sm:$0xff] %v675
        %v679 = vld [vmem:[%s3] sm:$0xff]
        %v680 = vld [vmem:[%s3 + $0x8] sm:$0xff]
        %v681 = vld [vmem:[%s3 + $0x10] sm:$0xff]
        %v682 = vld [vmem:[%s3 + $0x18] sm:$0xff]
        %v683 = vld [vmem:[%s3 + $0x20] sm:$0xff]
        %v684 = vld [vmem:[%s3 + $0x28] sm:$0xff]
        %v685 = vld [vmem:[%s3 + $0x30] sm:$0xff]
        %v686 = vld [vmem:[%s3 + $0x38] sm:$0xff]
        %687 = vmatprep.subr.mxu0 0.0
        %688 = vmatpush1.msra.mxu0 0.0
        %689 = vmatprep.subr.mxu0 0.0
        %690 = vmatpush1.msra.mxu0 0.0
        %691 = vmatprep.subr.mxu0 0.0
        %692 = vmatpush1.msra.mxu0 0.0
        %693 = vmatprep.subr.mxu0 0.0
        %694 = vmatpush1.msra.mxu0 0.0
        %695 = vmatprep.subr.mxu0 0.0
        %696 = vmatpush1.msra.mxu0 0.0
        %697 = vmatprep.subr.mxu0 0.0
        %698 = vmatpush1.msra.mxu0 0.0
        %699 = vmatprep.subr.mxu0 0.0
        %700 = vmatpush1.msra.mxu0 0.0
        %701 = vmatprep.subr.mxu0 0.0
        %702 = vmatpush1.msra.mxu0 0.0
        %703 = vmatprep.subr.mxu0 0.0
        %704 = vmatpush1.msra.mxu0 %v686
        %705 = vmatprep.subr.mxu0 0.0
        %706 = vmatpush1.msra.mxu0 %v685
        %707 = vmatprep.subr.mxu0 0.0
        %708 = vmatpush1.msra.mxu0 %v684
        %709 = vmatprep.subr.mxu0 0.0
        %710 = vmatpush1.msra.mxu0 %v683
        %711 = vmatprep.subr.mxu0 0.0
        %712 = vmatpush1.msra.mxu0 %v682
        %713 = vmatprep.subr.mxu0 0.0
        %714 = vmatpush1.msra.mxu0 %v681
        %715 = vmatprep.subr.mxu0 0.0
        %716 = vmatpush1.msra.mxu0 %v680
        %717 = vmatprep.subr.mxu0 0.0
        %718 = vmatpush1.msra.mxu0 %v679
        %719 = vmatprep.subr.mxu0 0.0
        %720 = vmatpush2.msra.mxu0 0.0
        %721 = vmatprep.subr.mxu0 0.0
        %722 = vmatpush2.msra.mxu0 0.0
        %723 = vmatprep.subr.mxu0 0.0
        %724 = vmatpush2.msra.mxu0 0.0
        %725 = vmatprep.subr.mxu0 0.0
        %726 = vmatpush2.msra.mxu0 0.0
        %727 = vmatprep.subr.mxu0 0.0
        %728 = vmatpush2.msra.mxu0 0.0
        %729 = vmatprep.subr.mxu0 0.0
        %730 = vmatpush2.msra.mxu0 0.0
        %731 = vmatprep.subr.mxu0 0.0
        %732 = vmatpush2.msra.mxu0 0.0
        %733 = vmatprep.subr.mxu0 0.0
        %734 = vmatpush2.msra.mxu0 0.0
        %735 = vmatprep.subr.mxu0 0.0
        %736 = vmatpush2.msra.mxu0 0.0
        %737 = vmatprep.subr.mxu0 0.0
        %738 = vmatpush2.msra.mxu0 0.0
        %739 = vmatprep.subr.mxu0 0.0
        %740 = vmatpush2.msra.mxu0 0.0
        %741 = vmatprep.subr.mxu0 0.0
        %742 = vmatpush2.msra.mxu0 0.0
        %743 = vmatprep.subr.mxu0 0.0
        %744 = vmatpush2.msra.mxu0 0.0
        %745 = vmatprep.subr.mxu0 0.0
        %746 = vmatpush2.msra.mxu0 0.0
        %747 = vmatprep.subr.mxu0 0.0
        %748 = vmatpush2.msra.mxu0 0.0
        %749 = vmatprep.subr.mxu0 0.0
        %750 = vmatpush2.msra.mxu0 0.0
        %751 = vmatprep.mubr.f32.mxu0 0.0
        %752 = vmatmul.mubr.f32.gmra.mxu0 %v561
        %v753 = vpop.f32.mrf.mxu0
        %v754 = vadd.f32 0.0, %v753
        %v755 = vpop.f32.mrf.mxu0
        %756 = vmatprep.mubr.f32.mxu0 0.0
        %757 = vmatmul.mubr.f32.gmra.mxu0 %v564
        %v758 = vpop.f32.mrf.mxu0
        %v759 = vadd.f32 0.0, %v758
        %v760 = vpop.f32.mrf.mxu0
        %761 = vmatprep.mubr.f32.mxu0 0.0
        %762 = vmatmul.mubr.f32.gmra.mxu0 %v567
        %v763 = vpop.f32.mrf.mxu0
        %v764 = vadd.f32 0.0, %v763
        %v765 = vpop.f32.mrf.mxu0
        %766 = vmatprep.mubr.f32.mxu0 0.0
        %767 = vmatmul.mubr.f32.gmra.mxu0 %v570
        %v768 = vpop.f32.mrf.mxu0
        %v769 = vadd.f32 0.0, %v768
        %v770 = vpop.f32.mrf.mxu0
        %771 = vmatprep.mubr.f32.mxu0 0.0
        %772 = vmatmul.mubr.f32.gmra.mxu0 %v573
        %v773 = vpop.f32.mrf.mxu0
        %v774 = vadd.f32 0.0, %v773
        %v775 = vpop.f32.mrf.mxu0
        %776 = vmatprep.mubr.f32.mxu0 0.0
        %777 = vmatmul.mubr.f32.gmra.mxu0 %v576
        %v778 = vpop.f32.mrf.mxu0
        %v779 = vadd.f32 0.0, %v778
        %v780 = vpop.f32.mrf.mxu0
        %781 = vmatprep.mubr.f32.mxu0 0.0
        %782 = vmatmul.mubr.f32.gmra.mxu0 %v579
        %v783 = vpop.f32.mrf.mxu0
        %v784 = vadd.f32 0.0, %v783
        %v785 = vpop.f32.mrf.mxu0
        %786 = vmatprep.mubr.f32.mxu0 0.0
        %787 = vmatmul.mubr.f32.gmra.mxu0 %v582
        %v788 = vpop.f32.mrf.mxu0
        %v789 = vadd.f32 0.0, %v788
        %v790 = vpop.f32.mrf.mxu0
        %791 = vmatprep.mubr.f32.mxu0 0.0
        %792 = vmatmul.mubr.f32.gmra.mxu0 %v585
        %v793 = vpop.f32.mrf.mxu0
        %v794 = vadd.f32 0.0, %v793
        %v795 = vpop.f32.mrf.mxu0
        %796 = vmatprep.mubr.f32.mxu0 0.0
        %797 = vmatmul.mubr.f32.gmra.mxu0 %v588
        %v798 = vpop.f32.mrf.mxu0
        %v799 = vadd.f32 0.0, %v798
        %v800 = vpop.f32.mrf.mxu0
        %801 = vmatprep.mubr.f32.mxu0 0.0
        %802 = vmatmul.mubr.f32.gmra.mxu0 %v591
        %v803 = vpop.f32.mrf.mxu0
        %v804 = vadd.f32 0.0, %v803
        %v805 = vpop.f32.mrf.mxu0
        %806 = vmatprep.mubr.f32.mxu0 0.0
        %807 = vmatmul.mubr.f32.gmra.mxu0 %v594
        %v808 = vpop.f32.mrf.mxu0
        %v809 = vadd.f32 0.0, %v808
        %v810 = vpop.f32.mrf.mxu0
        %811 = vmatprep.mubr.f32.mxu0 0.0
        %812 = vmatmul.mubr.f32.gmra.mxu0 %v597
        %v813 = vpop.f32.mrf.mxu0
        %v814 = vadd.f32 0.0, %v813
        %v815 = vpop.f32.mrf.mxu0
        %816 = vmatprep.mubr.f32.mxu0 0.0
        %817 = vmatmul.mubr.f32.gmra.mxu0 %v600
        %v818 = vpop.f32.mrf.mxu0
        %v819 = vadd.f32 0.0, %v818
        %v820 = vpop.f32.mrf.mxu0
        %821 = vmatprep.mubr.f32.mxu0 0.0
        %822 = vmatmul.mubr.f32.gmra.mxu0 %v603
        %v823 = vpop.f32.mrf.mxu0
        %v824 = vadd.f32 0.0, %v823
        %v825 = vpop.f32.mrf.mxu0
        %826 = vmatprep.mubr.f32.mxu0 0.0
        %827 = vmatmul.mubr.f32.gmra.mxu0 %v606
        %v828 = vpop.f32.mrf.mxu0
        %v829 = vadd.f32 0.0, %v828
        %v830 = vpop.f32.mrf.mxu0
        %831 = vdwg.mxu0
        %vm832 = vcmask 64512
        %833 = vst.msk [vmem:[%s277] sm:$0xff] %vm832, %v754
        %834 = vst.msk [vmem:[%s277 + $0x8] sm:$0xff] %vm832, %v759
        %835 = vst.msk [vmem:[%s277 + $0x10] sm:$0xff] %vm832, %v764
        %836 = vst.msk [vmem:[%s277 + $0x18] sm:$0xff] %vm832, %v769
        %837 = vst.msk [vmem:[%s277 + $0x20] sm:$0xff] %vm832, %v774
        %838 = vst.msk [vmem:[%s277 + $0x28] sm:$0xff] %vm832, %v779
        %839 = vst.msk [vmem:[%s277 + $0x30] sm:$0xff] %vm832, %v784
        %840 = vst.msk [vmem:[%s277 + $0x38] sm:$0xff] %vm832, %v789
        %841 = vst.msk [vmem:[%s277 + $0x40] sm:$0xff] %vm832, %v794
        %842 = vst.msk [vmem:[%s277 + $0x48] sm:$0xff] %vm832, %v799
        %843 = vst.msk [vmem:[%s277 + $0x50] sm:$0xff] %vm832, %v804
        %844 = vst.msk [vmem:[%s277 + $0x58] sm:$0xff] %vm832, %v809
        %845 = vst.msk [vmem:[%s277 + $0x60] sm:$0xff] %vm832, %v814
        %846 = vst.msk [vmem:[%s277 + $0x68] sm:$0xff] %vm832, %v819
        %847 = vst.msk [vmem:[%s277 + $0x70] sm:$0xff] %vm832, %v824
        %848 = vst.msk [vmem:[%s277 + $0x78] sm:$0xff] %vm832, %v829
        %s849 = smul.u32 16, %s21
        %p850 = scmp.lt.s32.totalorder %s849, 31
        %s851 = scalar_select %p850, %s849, 31
        %s852 = smul.addr %s851, 4
        %s853 = scalar_lea.vmem %s4, %s852
        %s854 = sand.u32 %s144, 1
        %s855 = scalar_lea.sflag [#allocation3], %s854
        %s856 = sand.u32 %s144, 1
        %s857 = smul.addr %s856, 8
        %s858 = scalar_lea.vmem [#allocation2], %s857
        %s859 = smul.u32 16, %s21
        %p860 = scmp.lt.s32.totalorder %s859, 31
        %s861 = scalar_select %p860, %s859, 31
        %s862 = smul.addr %s861, 8
        %s863 = scalar_lea.vmem %s6, %s862
        // Predicated region
        $region37: #{tpu_custom_call.1} parent=35 // pred_check
          %p864 = pneg %p128
        $region38: #{tpu_custom_call.1} parent=35 // pred_check_branch
          %866 = sbr.rel (%p864) target = $region40
        $region39: #{tpu_custom_call.1} parent=35 // pred_region
          %s867 = smul.u32 16, %s21
        $region40: #{tpu_custom_call.1} parent=35 // pred_fallthru
          _
        // Predicated region
        $region41: #{tpu_custom_call.1} parent=35 // pred_check
          %p868 = pneg %p154
        $region42: #{tpu_custom_call.1} parent=35 // pred_check_branch
          %870 = sbr.rel (%p868) target = $region44
        $region43: #{tpu_custom_call.1} parent=35 // pred_region
          %s872 = ssub.s32 128, 128
          %873 = vsyncadd %s855, %s872
          %s874 = smul.addr %s21, 128
          %s875 = scalar_lea.hbm %s5, %s874
          %s877 = sshll.u32 %s858, 4
          %s878 = int_to_ptr.vmem [resolvable:$true] %s877
          %880 = dma.vmem_to_hbm [thread:$0]  %s878, 128, %s875, %s855
        $region44: #{tpu_custom_call.1} parent=35 // pred_fallthru
          _
        // Predicated region
        $region45: #{tpu_custom_call.1} parent=35 // pred_check
          %p881 = pneg %p180
        $region46: #{tpu_custom_call.1} parent=35 // pred_check_branch
          %883 = sbr.rel (%p881) target = $region48
        $region47: #{tpu_custom_call.1} parent=35 // pred_region
          %s884 = smul.u32 16, %s21
        $region48: #{tpu_custom_call.1} parent=35 // pred_fallthru
          _
      $region36: #{tpu_custom_call.1} parent=5 // pred_fallthru
        _
      %p885 = scmp.le.s32.totalorder 2, %s16
      // Predicated region
      $region49: #{tpu_custom_call.1} parent=5 // pred_check
        %p886 = pneg %p885
      $region50: #{tpu_custom_call.1} parent=5 // pred_check_branch
        %888 = sbr.rel (%p886) target = $region52
      $region51: #{tpu_custom_call.1} parent=5 // pred_region
        %s889 = ssub.s32 %s16, 2
        // Predicated region
        $region53: #{tpu_custom_call.1} parent=51 // pred_check
          %p890 = pneg %p134
        $region54: #{tpu_custom_call.1} parent=51 // pred_check_branch
          %892 = sbr.rel (%p890) target = $region56
        $region55: #{tpu_custom_call.1} parent=51 // pred_region
          %s893 = smul.u32 16, %s22
          %p894 = scmp.lt.s32.totalorder %s893, 31
          %s895 = scalar_select %p894, %s893, 31
          %s896 = smul.addr %s895, 4
          %s897 = scalar_lea.vmem %s4, %s896
        $region56: #{tpu_custom_call.1} parent=51 // pred_fallthru
          _
        // Predicated region
        $region57: #{tpu_custom_call.1} parent=51 // pred_check
          %p898 = pneg %p160
        $region58: #{tpu_custom_call.1} parent=51 // pred_check_branch
          %900 = sbr.rel (%p898) target = $region60
        $region59: #{tpu_custom_call.1} parent=51 // pred_region
          %s901 = sand.u32 %s145, 1
          %s902 = scalar_lea.sflag [#allocation3], %s901
          %s903 = sand.u32 %s145, 1
          %s904 = smul.addr %s903, 8
          %s905 = scalar_lea.vmem [#allocation2], %s904
          %906 = dma.done %s902, 128
        $region60: #{tpu_custom_call.1} parent=51 // pred_fallthru
          _
        // Predicated region
        $region61: #{tpu_custom_call.1} parent=51 // pred_check
          %p907 = pneg %p186
        $region62: #{tpu_custom_call.1} parent=51 // pred_check_branch
          %909 = sbr.rel (%p907) target = $region64
        $region63: #{tpu_custom_call.1} parent=51 // pred_region
          %s910 = smul.u32 16, %s22
          %p911 = scmp.lt.s32.totalorder %s910, 31
          %s912 = scalar_select %p911, %s910, 31
          %s913 = smul.addr %s912, 8
          %s914 = scalar_lea.vmem %s6, %s913
        $region64: #{tpu_custom_call.1} parent=51 // pred_fallthru
          _
      $region52: #{tpu_custom_call.1} parent=5 // pred_fallthru
        _
    $region6: #{tpu_custom_call.1} parent=1 // loop_footer
      %s20 = sadd.s32 1, %s16
    $region7: #{tpu_custom_call.1} parent=1 // loop_footer_branch
      %15 = sbr.rel target = $region3
    $region8: #{tpu_custom_call.1} parent=1 // loop_exit
      _
    %915 = vsyncpa [#allocation3], 1
    %s916 = scalar_lea.sflag [#allocation3], 1
    %917 = vsyncpa %s916, 1

</llo_original>
